<compile_context>
chip_gen: v7x
topology: tpu7x:2x2x1
jax: 0.10.0
libtpu: 0.0.40
codegen_flags: <defaults>
</compile_context>

<pallas_src>
import jax
import jax.numpy as jnp
from jax.experimental import pallas as pl
from jax.experimental.pallas import tpu as pltpu


def _chunk_plan(lead_extent, row_bytes):
    """Static (start, size) chunks along the leading axis: <=4 outstanding
    DMAs, each >= ~2 MiB unless the whole array is smaller than that."""
    total_bytes = lead_extent * row_bytes
    max_chunks = 4
    min_chunk_bytes = 2 << 20  # ~2 MiB per DMA descriptor
    n_chunks = max(1, min(max_chunks, total_bytes // min_chunk_bytes))
    n_chunks = int(min(n_chunks, lead_extent))
    chunk_rows = -(-lead_extent // n_chunks)  # ceil div
    plan = []
    start = 0
    while start < lead_extent:
        size = min(chunk_rows, lead_extent - start)
        plan.append((start, size))
        start += size
    return plan


def _make_dma_copy_kernel(plan):
    """Kernel body: fire all HBM->HBM chunk DMAs, then wait on all of them."""

    def kernel(x_hbm, o_hbm, sem):
        copies = []
        for c, (start, size) in enumerate(plan):
            cp = pltpu.make_async_copy(
                x_hbm.at[pl.ds(start, size)],
                o_hbm.at[pl.ds(start, size)],
                sem.at[c],
            )
            cp.start()
            copies.append(cp)
        for cp in copies:
            cp.wait()

    return kernel


def _dma_identity_copy(x_shaped):
    """Direct HBM->HBM chunked-DMA copy of an array (no VMEM staging)."""
    itemsize = jnp.dtype(x_shaped.dtype).itemsize
    row_bytes = itemsize
    for d in x_shaped.shape[1:]:
        row_bytes *= int(d)
    lead = int(x_shaped.shape[0])
    total_bytes = lead * row_bytes

    plan = _chunk_plan(lead, row_bytes)

    return pl.pallas_call(
        _make_dma_copy_kernel(plan),
        out_shape=jax.ShapeDtypeStruct(x_shaped.shape, x_shaped.dtype),
        in_specs=[pl.BlockSpec(memory_space=pl.ANY)],
        out_specs=pl.BlockSpec(memory_space=pl.ANY),
        scratch_shapes=[pltpu.SemaphoreType.DMA((len(plan),))],
        cost_estimate=pl.CostEstimate(
            flops=0,
            transcendentals=0,
            bytes_accessed=2 * total_bytes,
        ),
    )(x_shaped)


def goronet_forward(x, use_kernel=True):
    """GoroNet.forward(x) == x.

    use_kernel=False is the genuinely fastest identity (zero HBM traffic);
    use_kernel=True routes through a direct HBM->HBM DMA Pallas kernel.
    """
    if not use_kernel or x.size == 0:
        return x

    orig_shape = x.shape
    total = int(x.size)

    # Present a chunkable leading axis: lane-dense (rows, 128) when the element
    # count allows, otherwise a flat 1D slab (DMA needs no lane alignment).
    if total % 128 == 0:
        shaped = x.reshape(total // 128, 128)
    else:
        shaped = x.reshape(total)

    out = _dma_identity_copy(shaped)
    return out.reshape(orig_shape)


if __name__ == "__main__":
    key = jax.random.PRNGKey(0)
    # Small NCHW input consistent with a conv-style module: batch=2, C=4, 16x16.
    x = jax.random.normal(key, (2, 4, 16, 16), dtype=jnp.float32)

    y = goronet_forward(x)
    jax.block_until_ready(y)

    assert y.shape == x.shape and y.dtype == x.dtype
    assert bool(jnp.all(y == x))
    print("KERNEL_OK")
</pallas_src>

<mosaic_0001>
module attributes {stable_mosaic.version = 11 : i64} {
  func.func @kernel(%arg0: memref<16x128xf32, #tpu.memory_space<any>>, %arg1: memref<16x128xf32, #tpu.memory_space<any>>, %arg2: memref<1x!tpu.dma_semaphore, #tpu.memory_space<semaphore_mem>>) attributes {dimension_semantics = [], scalar_prefetch = 0 : i64, scratch_operands = 1 : i64, tpu.core_type = #tpu.core_type<tc>} {
    %c0_i32 = arith.constant 0 : i32
    %c0_i32_0 = arith.constant 0 : i32
    %c0_i32_1 = arith.constant 0 : i32
    %0 = tpu.memref_slice %arg0[%c0_i32_0, %c0_i32_1] : memref<16x128xf32, #tpu.memory_space<any>> -> memref<16x128xf32, #tpu.memory_space<any>>
    %c0_i32_2 = arith.constant 0 : i32
    %c0_i32_3 = arith.constant 0 : i32
    %1 = tpu.memref_slice %arg1[%c0_i32_2, %c0_i32_3] : memref<16x128xf32, #tpu.memory_space<any>> -> memref<16x128xf32, #tpu.memory_space<any>>
    %2 = tpu.memref_slice %arg2[%c0_i32] : memref<1x!tpu.dma_semaphore, #tpu.memory_space<semaphore_mem>> -> memref<1x!tpu.dma_semaphore, #tpu.memory_space<semaphore_mem>>
    %3 = tpu.memref_squeeze %2 : memref<1x!tpu.dma_semaphore, #tpu.memory_space<semaphore_mem>> -> memref<!tpu.dma_semaphore, #tpu.memory_space<semaphore_mem>>
    tpu.enqueue_dma source(%0 : memref<16x128xf32, #tpu.memory_space<any>>) target(%1 : memref<16x128xf32, #tpu.memory_space<any>>) target_semaphore(%3 : memref<!tpu.dma_semaphore, #tpu.memory_space<semaphore_mem>>)
    %c0_i32_4 = arith.constant 0 : i32
    %c0_i32_5 = arith.constant 0 : i32
    %c0_i32_6 = arith.constant 0 : i32
    %4 = tpu.memref_slice %arg0[%c0_i32_5, %c0_i32_6] : memref<16x128xf32, #tpu.memory_space<any>> -> memref<16x128xf32, #tpu.memory_space<any>>
    %c0_i32_7 = arith.constant 0 : i32
    %c0_i32_8 = arith.constant 0 : i32
    %5 = tpu.memref_slice %arg1[%c0_i32_7, %c0_i32_8] : memref<16x128xf32, #tpu.memory_space<any>> -> memref<16x128xf32, #tpu.memory_space<any>>
    %6 = tpu.memref_slice %arg2[%c0_i32_4] : memref<1x!tpu.dma_semaphore, #tpu.memory_space<semaphore_mem>> -> memref<1x!tpu.dma_semaphore, #tpu.memory_space<semaphore_mem>>
    %7 = tpu.memref_squeeze %6 : memref<1x!tpu.dma_semaphore, #tpu.memory_space<semaphore_mem>> -> memref<!tpu.dma_semaphore, #tpu.memory_space<semaphore_mem>>
    tpu.wait_dma2 semaphore(%7 : memref<!tpu.dma_semaphore, #tpu.memory_space<semaphore_mem>>) src(%4 : memref<16x128xf32, #tpu.memory_space<any>>) dst(%5 : memref<16x128xf32, #tpu.memory_space<any>>)
    return
  }
}

</mosaic_0001>

<llo_original>
// kernel: tpu_custom_call.1
$region0: #{tpu_custom_call.1}
  #allocation0 [shape = 'u32[]', space=smem, size = 0x4, offset = 0x4, fixed_abs, tag = 'smem constant byte address 0x4 - core index']
  #allocation1 [shape = 'u32[144,128]{1,0:T(1,128)}', space=vmem, size = 0x12000, scoped, tag = 'internal scratch']
  #allocation2 [shape = 's32[1]{0}', space=sflag, size = 0x4, scoped, tag = 'scratch operand']
  #allocation3 [shape = 's32[]', space=sflag, size = 0x4, offset = 0, fixed_abs, tag = 'sflag constant byte address 0x0 - dummy sync flag']
  #allocation4 [shape = 'u32[0]{0}', space=smem, size = 0, offset = 0, fixed_abs, tag = 'smem constant byte address 0x0 - null']
  %s0 = inlined_call_operand.hbm [shape: f32[16,128], index: 0, kind: input, shape index: {}]
  %s1 = inlined_call_operand.hbm [shape: f32[16,128], index: 1, kind: output, shape index: {}]
  %s2 = sld [smem:[#allocation0]]
  $region2: #{tpu_custom_call.1} parent=0
    _
  %s4 = ssub.s32 1, %s2
  %s5 = scalar_select 0, %s4, %s2
  %s7 = sshll.u32 1, 14
  %s8 = sxor.u32 4294967295, %s7
  %s11 = sshll.u32 3, 24
  %s12 = sxor.u32 4294967295, %s11
  %s13 = sand.u32 0, %s12
  %s15 = sor.u32 %s13, 0
  %18 = dma.general %s0, 256, %s1, [#allocation2], [#allocation3], [#allocation4], %s15, 0
  %s19 = smul.u32 16, 1
  %s20 = sshll.u32 %s19, 4
  %21 = dma.done [#allocation2], %s20
  %22 = vsyncmov [#allocation2]
  %s23 = vpop.sfrf %22
  %p24 = scmp.eq.s32.totalorder %s23, 0
  %p25 = pneg %p24
  %27 = shalt.err (%p25)

</llo_original>
